<compile_context>
chip_gen: v7x
topology: tpu7x:2x2x1
jax: 0.10.0
libtpu: 0.0.40
codegen_flags: <defaults>
</compile_context>

<pallas_src>
import math

import jax
import jax.numpy as jnp
from jax.experimental import pallas as pl
from jax.experimental.pallas import tpu as pltpu

EPS = 1e-5                      # torch.nn.BatchNorm1d default
_LANE_BLOCK_TARGET = 1024       # lanes (f32) per grid step; raise on v5e/v6e for fewer steps


# --------------------------- in-kernel helpers ---------------------------
def _emit_conv_bank(x_ref, aux_ref, w_ref, x2c_ref, *, c_in, ntaps, maxpad, lanes):
    """Scatter the lane-shifted conv taps (+ a constant lane carrying the folded
    BN shift / dropped bias) into the im2col VMEM scratch and run the whole
    conv bank as ONE MXU matmul:  (c_total, K) @ (K, lanes),  K = c_in*ntaps + 1.

    aux_ref row j is a 0/1 mask that zeroes tap j wherever it would cross a
    batch-row boundary of the flattened lane axis (lane blocks always cover
    whole rows, so only O(maxpad) block-edge lanes additionally need zeroing).
    """
    xv = x_ref[...]                                             # (c_in, lanes) f32
    for j in range(ntaps):
        d = j - maxpad                                          # conv tap time offset
        r0 = j * c_in
        if d == 0:
            x2c_ref[r0:r0 + c_in, :] = xv
            continue
        lo, hi = max(0, -d), lanes - max(0, d)                  # dst lanes that have a source
        x2c_ref[r0:r0 + c_in, lo:hi] = (
            xv[:, lo + d:hi + d] * aux_ref[j:j + 1, lo:hi])     # zero taps crossing a row edge
        if d > 0:                                               # block-edge lanes stay zero
            x2c_ref[r0:r0 + c_in, hi:lanes] = jnp.zeros((c_in, d), jnp.float32)
        else:
            x2c_ref[r0:r0 + c_in, 0:lo] = jnp.zeros((c_in, -d), jnp.float32)
    # Constant lane: multiplies the last weight column (0 in pass 1, BN shift in pass 2).
    x2c_ref[ntaps * c_in:ntaps * c_in + 1, :] = jnp.ones((1, lanes), jnp.float32)
    # Channel mix on the MXU.  K is tiny (MXU far from saturated) but this removes
    # every per-tap MAC from the saturated VPU/VALU slot.
    return jnp.dot(w_ref[...], x2c_ref[...], preferred_element_type=jnp.float32)


# --------------------------- pass 1: BN statistics ---------------------------
def _make_stats_kernel(*, c_in, ntaps, maxpad, lanes):
    def kernel(x_ref, aux_ref, w_ref, stats_ref, x2c_ref):
        @pl.when(pl.program_id(1) == 0)
        def _init():
            stats_ref[...] = jnp.zeros_like(stats_ref)
        y = _emit_conv_bank(x_ref, aux_ref, w_ref, x2c_ref,
                            c_in=c_in, ntaps=ntaps, maxpad=maxpad, lanes=lanes)
        s1 = jnp.sum(y, axis=1, keepdims=True)                  # (c_total, 1)
        s2 = jnp.sum(y * y, axis=1, keepdims=True)              # (c_total, 1)
        stats_ref[...] += jnp.concatenate([s1, s2], axis=1)     # (c_total, 2) resident
    return kernel


# --------------- pass 2: conv + folded BN + ReLU + max-pool ---------------
def _make_apply_kernel(*, c_in, ntaps, maxpad, lanes):
    def kernel(x_ref, aux_ref, w_ref, o_ref, x2c_ref):
        # Matmul already contains BN scale (folded into W) and shift (ones lane).
        y = jnp.maximum(
            _emit_conv_bank(x_ref, aux_ref, w_ref, x2c_ref,
                            c_in=c_in, ntaps=ntaps, maxpad=maxpad, lanes=lanes),
            0.0)                                                 # (c_total, lanes)
        # max_pool1d(width=2, stride=1, pad=1), last step dropped: out[t]=max(y[t-1], y[t]).
        # y >= 0 after ReLU, so zeroing the neighbour at a row start acts like the -inf pad.
        prev = y[:, 0:lanes - 1] * (1.0 - aux_ref[ntaps:ntaps + 1, 1:lanes])
        o_ref[:, 1:lanes] = jnp.maximum(y[:, 1:lanes], prev)
        o_ref[:, 0:1] = y[:, 0:1]
    return kernel


# ------------------------------- wrapper -------------------------------
def conv1d_bank_with_max_pool(x, params, max_pool_width=2):
    """Forward pass of Conv1dBankWithMaxPool: (B, in_channels, T) -> (B, k*ck, T)."""
    assert max_pool_width == 2  # TODO(synk): general max_pool_width (module default is 2)
    weights = params["weights"]
    k = len(weights)
    ck, c_in, _ = weights[0].shape
    B, c_in_x, T = x.shape
    assert c_in_x == c_in
    c_total = k * ck
    maxpad = k // 2
    ntaps = k                                   # tap offsets d = -(k//2) .. (k-1)//2
    kaug = ntaps * c_in + 1                     # + constant lane for the folded BN shift

    # Merged tap-major weight matrix: W[bi*ck+o, j*c_in+c] = w_bi[o, c, dk], j = dk - ks//2 + maxpad.
    w_rows = []
    for bi in range(k):
        ks = bi + 1
        p = ks // 2
        w = weights[bi].astype(jnp.float32)                             # (ck, c_in, ks)
        wb = jnp.zeros((ck, ntaps, c_in), jnp.float32)
        wb = wb.at[:, maxpad - p:maxpad - p + ks, :].set(jnp.transpose(w, (0, 2, 1)))
        w_rows.append(wb.reshape(ck, ntaps * c_in))
    w_full = jnp.concatenate(w_rows, axis=0)                            # (c_total, ntaps*c_in)

    # Lane-dense layout: (B, c_in, T) -> (c_in, B*T).  Pick a batch block so each grid step
    # covers whole rows and ~_LANE_BLOCK_TARGET lanes (multiple of 128, or the full extent).
    if B * T <= _LANE_BLOCK_TARGET:
        b_blk = B
    else:
        row_step = 128 // math.gcd(T, 128)      # smallest row count with 128-aligned lane width
        b_blk = row_step * max(1, _LANE_BLOCK_TARGET // (row_step * T))
        if b_blk >= B:                          # degenerate: one block is simplest & legal
            b_blk = B
    bp = -(-B // b_blk) * b_blk                 # pad batch to a multiple of b_blk
    n_blk = bp // b_blk
    l_blk = b_blk * T
    # TODO(synk): halo'd time tiling for a single very long row (T >> lane target) so one
    # row never has to fit in one VMEM block on v7x (64 MiB).

    x32 = jnp.transpose(x.astype(jnp.float32), (1, 0, 2))               # (c_in, B, T)
    if bp != B:
        # Zero rows are exact for the BN stats: the conv is bias-free, so they contribute 0.
        x32 = jnp.pad(x32, ((0, 0), (0, bp - B), (0, 0)))
    x_flat = x32.reshape(c_in, bp * T)

    # Resident aux masks: row j zeroes tap j where it crosses a row boundary of the
    # flattened lane axis; the last row flags t == 0 (left pad) for the max pool.
    t_in_row = jnp.arange(l_blk, dtype=jnp.int32) % T
    aux_rows = [((t_in_row + (j - maxpad) >= 0) & (t_in_row + (j - maxpad) < T))
                .astype(jnp.float32) for j in range(ntaps)]
    aux_rows.append((t_in_row == 0).astype(jnp.float32))
    aux = jnp.stack(aux_rows, axis=0)                                   # (ntaps+1, l_blk)

    # ---- pass 1: per-channel sum / sum-of-squares of the bias-free conv outputs.
    n_parts = 2 if (n_blk >= 2 and n_blk % 2 == 0) else 1               # v7x megacore split
    blk_pp = n_blk // n_parts
    w_stats = jnp.concatenate([w_full, jnp.zeros((c_total, 1), jnp.float32)], axis=1)
    stats_parts = pl.pallas_call(
        _make_stats_kernel(c_in=c_in, ntaps=ntaps, maxpad=maxpad, lanes=l_blk),
        out_shape=jax.ShapeDtypeStruct((n_parts, c_total, 2), jnp.float32),
        grid=(n_parts, blk_pp),
        in_specs=[
            pl.BlockSpec((c_in, l_blk), lambda p, j: (0, p * blk_pp + j)),
            pl.BlockSpec((ntaps + 1, l_blk), lambda p, j: (0, 0)),
            pl.BlockSpec((c_total, kaug), lambda p, j: (0, 0)),
        ],
        out_specs=pl.BlockSpec((None, c_total, 2), lambda p, j: (p, 0, 0)),
        scratch_shapes=[pltpu.VMEM((kaug, l_blk), jnp.float32)],
        compiler_params=pltpu.CompilerParams(
            dimension_semantics=("parallel", "arbitrary"),
            vmem_limit_bytes=32 * 1024 * 1024),
    )(x_flat, aux, w_stats)

    # ---- fold BatchNorm into one per-channel scale/shift (tiny XLA glue).
    stats = jnp.sum(stats_parts, axis=0)                                # (c_total, 2)
    n = float(B * T)                                                    # real batch only
    mean = stats[:, 0] / n
    var = jnp.maximum(stats[:, 1] / n - mean * mean, 0.0)               # biased variance
    gamma = jnp.concatenate([params["gammas"][i].astype(jnp.float32) for i in range(k)])
    beta = jnp.concatenate([params["betas"][i].astype(jnp.float32) for i in range(k)])
    scale = gamma * jax.lax.rsqrt(var + EPS)
    shift = beta - mean * scale
    # Conv bias is dropped everywhere: training-mode BN subtracts the batch mean, which
    # cancels it.  (Eval-mode/running-stats BN would need the bias restored.)
    w_apply = jnp.concatenate([w_full * scale[:, None], shift[:, None]], axis=1)

    # ---- pass 2: conv + folded BN + ReLU + width-2 max pool, lane-dense stores.
    # (Optional on v6e/v7x: cast w_apply / x to bf16 for full-rate MXU if downstream tolerates it.)
    y_flat = pl.pallas_call(
        _make_apply_kernel(c_in=c_in, ntaps=ntaps, maxpad=maxpad, lanes=l_blk),
        out_shape=jax.ShapeDtypeStruct((c_total, bp * T), jnp.float32),
        grid=(n_blk,),
        in_specs=[
            pl.BlockSpec((c_in, l_blk), lambda b: (0, b)),
            pl.BlockSpec((ntaps + 1, l_blk), lambda b: (0, 0)),
            pl.BlockSpec((c_total, kaug), lambda b: (0, 0)),
        ],
        out_specs=pl.BlockSpec((c_total, l_blk), lambda b: (0, b)),
        scratch_shapes=[pltpu.VMEM((kaug, l_blk), jnp.float32)],
        compiler_params=pltpu.CompilerParams(
            dimension_semantics=("parallel",),
            vmem_limit_bytes=32 * 1024 * 1024),
    )(x_flat, aux, w_apply)

    out = jnp.transpose(y_flat.reshape(c_total, bp, T), (1, 0, 2))[:B]  # layout plumbing back
    return out


# ------------------------- pure-JAX reference -------------------------
def conv1d_bank_with_max_pool_ref(x, params):
    """Direct mirror of the PyTorch module (training-mode BatchNorm, bias kept)."""
    weights = params["weights"]
    k = len(weights)
    ck, c_in, _ = weights[0].shape
    B, _, T = x.shape
    x = x.astype(jnp.float32)
    branches = []
    for i in range(k):
        ks = i + 1
        p = ks // 2
        w = weights[i].astype(jnp.float32)              # (ck, c_in, ks)
        b = params["biases"][i].astype(jnp.float32)     # (ck,)
        xp = jnp.pad(x, ((0, 0), (0, 0), (p, p)))
        t_full = T + 2 * p - ks + 1
        conv = jnp.zeros((B, ck, t_full), jnp.float32)
        for dk in range(ks):
            conv = conv + jnp.einsum("oc,bct->bot", w[:, :, dk],
                                     xp[:, :, dk:dk + t_full],
                                     precision=jax.lax.Precision.HIGHEST)
        conv = conv + b[None, :, None]
        conv = conv[:, :, :T]                           # even ks: drop last step
        mean = conv.mean(axis=(0, 2), keepdims=True)
        var = ((conv - mean) ** 2).mean(axis=(0, 2), keepdims=True)
        hn = (conv - mean) / jnp.sqrt(var + EPS)
        hn = (hn * params["gammas"][i][None, :, None]
              + params["betas"][i][None, :, None])
        branches.append(jnp.maximum(hn, 0.0))
    y = jnp.concatenate(branches, axis=1)               # (B, k*ck, T)
    ypad = jnp.pad(y, ((0, 0), (0, 0), (1, 1)), constant_values=-jnp.inf)
    pooled = jnp.maximum(ypad[:, :, :-1], ypad[:, :, 1:])    # length T+1
    return pooled[:, :, :T]


# ------------------------------ main ------------------------------
if __name__ == "__main__":
    B, C_IN, T = 2, 4, 16
    K_BANK, CK = 4, 8      # kernel sizes 1..4, ck=8 -> 32 output channels

    key = jax.random.PRNGKey(0)
    keys = jax.random.split(key, 4 * K_BANK + 1)
    params = {"weights": [], "biases": [], "gammas": [], "betas": []}
    for i in range(K_BANK):
        ks = i + 1
        params["weights"].append(
            0.3 * jax.random.normal(keys[4 * i + 0], (CK, C_IN, ks), jnp.float32))
        params["biases"].append(
            0.1 * jax.random.normal(keys[4 * i + 1], (CK,), jnp.float32))
        params["gammas"].append(
            1.0 + 0.1 * jax.random.normal(keys[4 * i + 2], (CK,), jnp.float32))
        params["betas"].append(
            0.1 * jax.random.normal(keys[4 * i + 3], (CK,), jnp.float32))
    x = jax.random.normal(keys[-1], (B, C_IN, T), jnp.float32)

    fwd = jax.jit(conv1d_bank_with_max_pool)
    out = jax.block_until_ready(fwd(x, params))
    ref = jax.block_until_ready(conv1d_bank_with_max_pool_ref(x, params))

    assert out.shape == (B, K_BANK * CK, T), out.shape
    max_err = float(jnp.max(jnp.abs(out - ref)))
    # Tolerance is a safety net for platforms whose MXU contracts f32 via bf16 passes;
    # with full-precision f32 contraction the two paths agree to ~1e-6.
    assert jnp.allclose(out, ref, atol=2e-2, rtol=2e-2), max_err
    print("KERNEL_OK")
</pallas_src>

<mosaic_0001>
module attributes {stable_mosaic.version = 11 : i64} {
  func.func @kernel(%arg0: i32, %arg1: memref<4x32xf32, #tpu.memory_space<vmem>>, %arg2: memref<5x32xf32, #tpu.memory_space<vmem>>, %arg3: memref<32x17xf32, #tpu.memory_space<vmem>>, %arg4: memref<32x32xf32, #tpu.memory_space<vmem>>, %arg5: memref<17x32xf32, #tpu.memory_space<vmem>>) attributes {dimension_semantics = [#tpu.dimension_semantics<parallel>], iteration_bounds = array<i64: 1>, scalar_prefetch = 0 : i64, scratch_operands = 1 : i64, tpu.core_type = #tpu.core_type<tc>, window_params = [{transform_indices = @transform_0, window_bounds = array<i64: 4, 32>}, {pipeline_mode = #tpu.pipeline_mode<synchronous>, transform_indices = @transform_1, window_bounds = array<i64: 5, 32>}, {pipeline_mode = #tpu.pipeline_mode<synchronous>, transform_indices = @transform_2, window_bounds = array<i64: 32, 17>}, {transform_indices = @transform_3, window_bounds = array<i64: 32, 32>}]} {
    %c0 = arith.constant 0 : index
    %c0_0 = arith.constant 0 : index
    %0 = vector.load %arg1[%c0, %c0_0] : memref<4x32xf32, #tpu.memory_space<vmem>>, vector<4x32xf32>
    %1 = vector.extract_strided_slice %0 {offsets = [0, 0], sizes = [4, 30], strides = [1, 1]} : vector<4x32xf32> to vector<4x30xf32>
    %c0_1 = arith.constant 0 : index
    %c2 = arith.constant 2 : index
    %2 = vector.load %arg2[%c0_1, %c2] : memref<5x32xf32, #tpu.memory_space<vmem>>, vector<1x30xf32>
    %3 = vector.broadcast %2 : vector<1x30xf32> to vector<4x30xf32>
    %4 = arith.mulf %1, %3 : vector<4x30xf32>
    %c0_2 = arith.constant 0 : index
    %c2_3 = arith.constant 2 : index
    %5 = vector.load %arg5[%c0_2, %c2_3] : memref<17x32xf32, #tpu.memory_space<vmem>>, vector<4x30xf32>
    tpu.vector_store %arg5[%c0_2, %c2_3], %4 {strides = array<i32>} : memref<17x32xf32, #tpu.memory_space<vmem>>, vector<4x30xf32>,
    %cst = arith.constant 0.000000e+00 : f32
    %6 = vector.broadcast %cst : f32 to vector<4x2xf32>
    %c0_4 = arith.constant 0 : index
    %c0_5 = arith.constant 0 : index
    %7 = vector.load %arg5[%c0_4, %c0_5] : memref<17x32xf32, #tpu.memory_space<vmem>>, vector<4x2xf32>
    tpu.vector_store %arg5[%c0_4, %c0_5], %6 {strides = array<i32>} : memref<17x32xf32, #tpu.memory_space<vmem>>, vector<4x2xf32>,
    %8 = vector.extract_strided_slice %0 {offsets = [0, 0], sizes = [4, 31], strides = [1, 1]} : vector<4x32xf32> to vector<4x31xf32>
    %c1 = arith.constant 1 : index
    %c1_6 = arith.constant 1 : index
    %9 = vector.load %arg2[%c1, %c1_6] : memref<5x32xf32, #tpu.memory_space<vmem>>, vector<1x31xf32>
    %10 = vector.broadcast %9 : vector<1x31xf32> to vector<4x31xf32>
    %11 = arith.mulf %8, %10 : vector<4x31xf32>
    %c4 = arith.constant 4 : index
    %c1_7 = arith.constant 1 : index
    %12 = vector.load %arg5[%c4, %c1_7] : memref<17x32xf32, #tpu.memory_space<vmem>>, vector<4x31xf32>
    tpu.vector_store %arg5[%c4, %c1_7], %11 {strides = array<i32>} : memref<17x32xf32, #tpu.memory_space<vmem>>, vector<4x31xf32>,
    %cst_8 = arith.constant 0.000000e+00 : f32
    %13 = vector.broadcast %cst_8 : f32 to vector<4x1xf32>
    %c4_9 = arith.constant 4 : index
    %c0_10 = arith.constant 0 : index
    %14 = vector.load %arg5[%c4_9, %c0_10] : memref<17x32xf32, #tpu.memory_space<vmem>>, vector<4x1xf32>
    tpu.vector_store %arg5[%c4_9, %c0_10], %13 {strides = array<i32>} : memref<17x32xf32, #tpu.memory_space<vmem>>, vector<4x1xf32>,
    %c8 = arith.constant 8 : index
    %c0_11 = arith.constant 0 : index
    %15 = vector.load %arg5[%c8, %c0_11] : memref<17x32xf32, #tpu.memory_space<vmem>>, vector<4x32xf32>
    tpu.vector_store %arg5[%c8, %c0_11], %0 {strides = array<i32>} : memref<17x32xf32, #tpu.memory_space<vmem>>, vector<4x32xf32>,
    %16 = vector.extract_strided_slice %0 {offsets = [0, 1], sizes = [4, 31], strides = [1, 1]} : vector<4x32xf32> to vector<4x31xf32>
    %c3 = arith.constant 3 : index
    %c0_12 = arith.constant 0 : index
    %17 = vector.load %arg2[%c3, %c0_12] : memref<5x32xf32, #tpu.memory_space<vmem>>, vector<1x31xf32>
    %18 = vector.broadcast %17 : vector<1x31xf32> to vector<4x31xf32>
    %19 = arith.mulf %16, %18 : vector<4x31xf32>
    %c12 = arith.constant 12 : index
    %c0_13 = arith.constant 0 : index
    %20 = vector.load %arg5[%c12, %c0_13] : memref<17x32xf32, #tpu.memory_space<vmem>>, vector<4x31xf32>
    tpu.vector_store %arg5[%c12, %c0_13], %19 {strides = array<i32>} : memref<17x32xf32, #tpu.memory_space<vmem>>, vector<4x31xf32>,
    %cst_14 = arith.constant 0.000000e+00 : f32
    %21 = vector.broadcast %cst_14 : f32 to vector<4x1xf32>
    %c12_15 = arith.constant 12 : index
    %c31 = arith.constant 31 : index
    %22 = vector.load %arg5[%c12_15, %c31] : memref<17x32xf32, #tpu.memory_space<vmem>>, vector<4x1xf32>
    tpu.vector_store %arg5[%c12_15, %c31], %21 {strides = array<i32>} : memref<17x32xf32, #tpu.memory_space<vmem>>, vector<4x1xf32>,
    %cst_16 = arith.constant 1.000000e+00 : f32
    %23 = vector.broadcast %cst_16 : f32 to vector<1x32xf32>
    %c16 = arith.constant 16 : index
    %c0_17 = arith.constant 0 : index
    %24 = vector.load %arg5[%c16, %c0_17] : memref<17x32xf32, #tpu.memory_space<vmem>>, vector<1x32xf32>
    tpu.vector_store %arg5[%c16, %c0_17], %23 {strides = array<i32>} : memref<17x32xf32, #tpu.memory_space<vmem>>, vector<1x32xf32>,
    %c0_18 = arith.constant 0 : index
    %c0_19 = arith.constant 0 : index
    %25 = vector.load %arg3[%c0_18, %c0_19] : memref<32x17xf32, #tpu.memory_space<vmem>>, vector<32x17xf32>
    %c0_20 = arith.constant 0 : index
    %c0_21 = arith.constant 0 : index
    %26 = vector.load %arg5[%c0_20, %c0_21] : memref<17x32xf32, #tpu.memory_space<vmem>>, vector<17x32xf32>
    %cst_22 = arith.constant dense<0.000000e+00> : vector<32x32xf32>
    %27 = tpu.matmul %25, %26, %cst_22 {dimension_numbers = #tpu.dot_dimension_numbers<[1], [0], [0], [1], [0, 0, 1, 1], [], []>} : vector<32x17xf32>, vector<17x32xf32>, vector<32x32xf32> -> vector<32x32xf32>
    %cst_23 = arith.constant 0.000000e+00 : f32
    %28 = vector.broadcast %cst_23 : f32 to vector<32x32xf32>
    %29 = arith.maximumf %27, %28 : vector<32x32xf32>
    %30 = vector.extract_strided_slice %29 {offsets = [0, 0], sizes = [32, 31], strides = [1, 1]} : vector<32x32xf32> to vector<32x31xf32>
    %c4_24 = arith.constant 4 : index
    %c1_25 = arith.constant 1 : index
    %31 = vector.load %arg2[%c4_24, %c1_25] : memref<5x32xf32, #tpu.memory_space<vmem>>, vector<1x31xf32>
    %cst_26 = arith.constant 1.000000e+00 : f32
    %32 = vector.broadcast %cst_26 : f32 to vector<1x31xf32>
    %33 = arith.subf %32, %31 : vector<1x31xf32>
    %34 = vector.broadcast %33 : vector<1x31xf32> to vector<32x31xf32>
    %35 = arith.mulf %30, %34 : vector<32x31xf32>
    %36 = vector.extract_strided_slice %29 {offsets = [0, 1], sizes = [32, 31], strides = [1, 1]} : vector<32x32xf32> to vector<32x31xf32>
    %37 = arith.maximumf %36, %35 : vector<32x31xf32>
    %c0_27 = arith.constant 0 : index
    %c1_28 = arith.constant 1 : index
    %38 = vector.load %arg4[%c0_27, %c1_28] : memref<32x32xf32, #tpu.memory_space<vmem>>, vector<32x31xf32>
    tpu.vector_store %arg4[%c0_27, %c1_28], %37 {strides = array<i32>} : memref<32x32xf32, #tpu.memory_space<vmem>>, vector<32x31xf32>,
    %39 = vector.extract_strided_slice %29 {offsets = [0, 0], sizes = [32, 1], strides = [1, 1]} : vector<32x32xf32> to vector<32x1xf32>
    %c0_29 = arith.constant 0 : index
    %c0_30 = arith.constant 0 : index
    %40 = vector.load %arg4[%c0_29, %c0_30] : memref<32x32xf32, #tpu.memory_space<vmem>>, vector<32x1xf32>
    tpu.vector_store %arg4[%c0_29, %c0_30], %39 {strides = array<i32>} : memref<32x32xf32, #tpu.memory_space<vmem>>, vector<32x1xf32>,
    return
  }
  func.func @transform_0(%arg0: i32) -> (i32, i32) {
    %c0_i32 = arith.constant 0 : i32
    %c0_i32_0 = arith.constant 0 : i32
    return %c0_i32, %arg0 : i32, i32
  }
  func.func @transform_1(%arg0: i32) -> (i32, i32) {
    %c0_i32 = arith.constant 0 : i32
    %c0_i32_0 = arith.constant 0 : i32
    %c0_i32_1 = arith.constant 0 : i32
    return %c0_i32, %c0_i32_0 : i32, i32
  }
  func.func @transform_2(%arg0: i32) -> (i32, i32) {
    %c0_i32 = arith.constant 0 : i32
    %c0_i32_0 = arith.constant 0 : i32
    %c0_i32_1 = arith.constant 0 : i32
    return %c0_i32, %c0_i32_0 : i32, i32
  }
  func.func @transform_3(%arg0: i32) -> (i32, i32) {
    %c0_i32 = arith.constant 0 : i32
    %c0_i32_0 = arith.constant 0 : i32
    return %c0_i32, %arg0 : i32, i32
  }
}

module attributes {stable_mosaic.version = 11 : i64} {
  func.func @kernel(%arg0: i32, %arg1: i32, %arg2: memref<4x32xf32, #tpu.memory_space<vmem>>, %arg3: memref<5x32xf32, #tpu.memory_space<vmem>>, %arg4: memref<32x17xf32, #tpu.memory_space<vmem>>, %arg5: memref<1x32x2xf32, #tpu.memory_space<vmem>>, %arg6: memref<17x32xf32, #tpu.memory_space<vmem>>) attributes {dimension_semantics = [#tpu.dimension_semantics<parallel>, #tpu.dimension_semantics<arbitrary>], iteration_bounds = array<i64: 1, 1>, scalar_prefetch = 0 : i64, scratch_operands = 1 : i64, tpu.core_type = #tpu.core_type<tc>, window_params = [{transform_indices = @transform_0, window_bounds = array<i64: 4, 32>}, {pipeline_mode = #tpu.pipeline_mode<synchronous>, transform_indices = @transform_1, window_bounds = array<i64: 5, 32>}, {pipeline_mode = #tpu.pipeline_mode<synchronous>, transform_indices = @transform_2, window_bounds = array<i64: 32, 17>}, {transform_indices = @transform_3, window_bounds = array<i64: 1, 32, 2>}]} {
    %c0_i32 = arith.constant 0 : i32
    %0 = arith.cmpi eq, %arg1, %c0_i32 : i32
    %1 = arith.extui %0 : i1 to i32
    %c0_i32_0 = arith.constant 0 : i32
    %2 = arith.cmpi ne, %1, %c0_i32_0 : i32
    scf.if %2 {
      %cst_32 = arith.constant 0.000000e+00 : f32
      %43 = vector.broadcast %cst_32 : f32 to vector<32x2xf32>
      %c0_33 = arith.constant 0 : index
      %c0_34 = arith.constant 0 : index
      %c0_35 = arith.constant 0 : index
      %44 = vector.load %arg5[%c0_33, %c0_34, %c0_35] : memref<1x32x2xf32, #tpu.memory_space<vmem>>, vector<1x32x2xf32>
      %45 = vector.shape_cast %44 : vector<1x32x2xf32> to vector<32x2xf32>
      %46 = vector.shape_cast %43 : vector<32x2xf32> to vector<1x32x2xf32>
      tpu.vector_store %arg5[%c0_33, %c0_34, %c0_35], %46 {strides = array<i32>} : memref<1x32x2xf32, #tpu.memory_space<vmem>>, vector<1x32x2xf32>,
    } else {
    }
    %c0 = arith.constant 0 : index
    %c0_1 = arith.constant 0 : index
    %3 = vector.load %arg2[%c0, %c0_1] : memref<4x32xf32, #tpu.memory_space<vmem>>, vector<4x32xf32>
    %4 = vector.extract_strided_slice %3 {offsets = [0, 0], sizes = [4, 30], strides = [1, 1]} : vector<4x32xf32> to vector<4x30xf32>
    %c0_2 = arith.constant 0 : index
    %c2 = arith.constant 2 : index
    %5 = vector.load %arg3[%c0_2, %c2] : memref<5x32xf32, #tpu.memory_space<vmem>>, vector<1x30xf32>
    %6 = vector.broadcast %5 : vector<1x30xf32> to vector<4x30xf32>
    %7 = arith.mulf %4, %6 : vector<4x30xf32>
    %c0_3 = arith.constant 0 : index
    %c2_4 = arith.constant 2 : index
    %8 = vector.load %arg6[%c0_3, %c2_4] : memref<17x32xf32, #tpu.memory_space<vmem>>, vector<4x30xf32>
    tpu.vector_store %arg6[%c0_3, %c2_4], %7 {strides = array<i32>} : memref<17x32xf32, #tpu.memory_space<vmem>>, vector<4x30xf32>,
    %cst = arith.constant 0.000000e+00 : f32
    %9 = vector.broadcast %cst : f32 to vector<4x2xf32>
    %c0_5 = arith.constant 0 : index
    %c0_6 = arith.constant 0 : index
    %10 = vector.load %arg6[%c0_5, %c0_6] : memref<17x32xf32, #tpu.memory_space<vmem>>, vector<4x2xf32>
    tpu.vector_store %arg6[%c0_5, %c0_6], %9 {strides = array<i32>} : memref<17x32xf32, #tpu.memory_space<vmem>>, vector<4x2xf32>,
    %11 = vector.extract_strided_slice %3 {offsets = [0, 0], sizes = [4, 31], strides = [1, 1]} : vector<4x32xf32> to vector<4x31xf32>
    %c1 = arith.constant 1 : index
    %c1_7 = arith.constant 1 : index
    %12 = vector.load %arg3[%c1, %c1_7] : memref<5x32xf32, #tpu.memory_space<vmem>>, vector<1x31xf32>
    %13 = vector.broadcast %12 : vector<1x31xf32> to vector<4x31xf32>
    %14 = arith.mulf %11, %13 : vector<4x31xf32>
    %c4 = arith.constant 4 : index
    %c1_8 = arith.constant 1 : index
    %15 = vector.load %arg6[%c4, %c1_8] : memref<17x32xf32, #tpu.memory_space<vmem>>, vector<4x31xf32>
    tpu.vector_store %arg6[%c4, %c1_8], %14 {strides = array<i32>} : memref<17x32xf32, #tpu.memory_space<vmem>>, vector<4x31xf32>,
    %cst_9 = arith.constant 0.000000e+00 : f32
    %16 = vector.broadcast %cst_9 : f32 to vector<4x1xf32>
    %c4_10 = arith.constant 4 : index
    %c0_11 = arith.constant 0 : index
    %17 = vector.load %arg6[%c4_10, %c0_11] : memref<17x32xf32, #tpu.memory_space<vmem>>, vector<4x1xf32>
    tpu.vector_store %arg6[%c4_10, %c0_11], %16 {strides = array<i32>} : memref<17x32xf32, #tpu.memory_space<vmem>>, vector<4x1xf32>,
    %c8 = arith.constant 8 : index
    %c0_12 = arith.constant 0 : index
    %18 = vector.load %arg6[%c8, %c0_12] : memref<17x32xf32, #tpu.memory_space<vmem>>, vector<4x32xf32>
    tpu.vector_store %arg6[%c8, %c0_12], %3 {strides = array<i32>} : memref<17x32xf32, #tpu.memory_space<vmem>>, vector<4x32xf32>,
    %19 = vector.extract_strided_slice %3 {offsets = [0, 1], sizes = [4, 31], strides = [1, 1]} : vector<4x32xf32> to vector<4x31xf32>
    %c3 = arith.constant 3 : index
    %c0_13 = arith.constant 0 : index
    %20 = vector.load %arg3[%c3, %c0_13] : memref<5x32xf32, #tpu.memory_space<vmem>>, vector<1x31xf32>
    %21 = vector.broadcast %20 : vector<1x31xf32> to vector<4x31xf32>
    %22 = arith.mulf %19, %21 : vector<4x31xf32>
    %c12 = arith.constant 12 : index
    %c0_14 = arith.constant 0 : index
    %23 = vector.load %arg6[%c12, %c0_14] : memref<17x32xf32, #tpu.memory_space<vmem>>, vector<4x31xf32>
    tpu.vector_store %arg6[%c12, %c0_14], %22 {strides = array<i32>} : memref<17x32xf32, #tpu.memory_space<vmem>>, vector<4x31xf32>,
    %cst_15 = arith.constant 0.000000e+00 : f32
    %24 = vector.broadcast %cst_15 : f32 to vector<4x1xf32>
    %c12_16 = arith.constant 12 : index
    %c31 = arith.constant 31 : index
    %25 = vector.load %arg6[%c12_16, %c31] : memref<17x32xf32, #tpu.memory_space<vmem>>, vector<4x1xf32>
    tpu.vector_store %arg6[%c12_16, %c31], %24 {strides = array<i32>} : memref<17x32xf32, #tpu.memory_space<vmem>>, vector<4x1xf32>,
    %cst_17 = arith.constant 1.000000e+00 : f32
    %26 = vector.broadcast %cst_17 : f32 to vector<1x32xf32>
    %c16 = arith.constant 16 : index
    %c0_18 = arith.constant 0 : index
    %27 = vector.load %arg6[%c16, %c0_18] : memref<17x32xf32, #tpu.memory_space<vmem>>, vector<1x32xf32>
    tpu.vector_store %arg6[%c16, %c0_18], %26 {strides = array<i32>} : memref<17x32xf32, #tpu.memory_space<vmem>>, vector<1x32xf32>,
    %c0_19 = arith.constant 0 : index
    %c0_20 = arith.constant 0 : index
    %28 = vector.load %arg4[%c0_19, %c0_20] : memref<32x17xf32, #tpu.memory_space<vmem>>, vector<32x17xf32>
    %c0_21 = arith.constant 0 : index
    %c0_22 = arith.constant 0 : index
    %29 = vector.load %arg6[%c0_21, %c0_22] : memref<17x32xf32, #tpu.memory_space<vmem>>, vector<17x32xf32>
    %cst_23 = arith.constant dense<0.000000e+00> : vector<32x32xf32>
    %30 = tpu.matmul %28, %29, %cst_23 {dimension_numbers = #tpu.dot_dimension_numbers<[1], [0], [0], [1], [0, 0, 1, 1], [], []>} : vector<32x17xf32>, vector<17x32xf32>, vector<32x32xf32> -> vector<32x32xf32>
    %cst_24 = arith.constant dense<0.000000e+00> : vector<32xf32>
    %31 = vector.multi_reduction <add>, %30, %cst_24 [1] : vector<32x32xf32> to vector<32xf32>
    %32 = vector.shape_cast %31 : vector<32xf32> to vector<32x1xf32>
    %33 = arith.mulf %30, %30 : vector<32x32xf32>
    %cst_25 = arith.constant dense<0.000000e+00> : vector<32xf32>
    %34 = vector.multi_reduction <add>, %33, %cst_25 [1] : vector<32x32xf32> to vector<32xf32>
    %35 = vector.shape_cast %34 : vector<32xf32> to vector<32x1xf32>
    %c0_26 = arith.constant 0 : index
    %c0_27 = arith.constant 0 : index
    %c0_28 = arith.constant 0 : index
    %36 = vector.load %arg5[%c0_26, %c0_27, %c0_28] : memref<1x32x2xf32, #tpu.memory_space<vmem>>, vector<1x32x2xf32>
    %37 = vector.shape_cast %36 : vector<1x32x2xf32> to vector<32x2xf32>
    %38 = tpu.concatenate %32, %35 in 1 : vector<32x1xf32>, vector<32x1xf32> -> vector<32x2xf32>
    %39 = arith.addf %37, %38 : vector<32x2xf32>
    %c0_29 = arith.constant 0 : index
    %c0_30 = arith.constant 0 : index
    %c0_31 = arith.constant 0 : index
    %40 = vector.load %arg5[%c0_29, %c0_30, %c0_31] : memref<1x32x2xf32, #tpu.memory_space<vmem>>, vector<1x32x2xf32>
    %41 = vector.shape_cast %40 : vector<1x32x2xf32> to vector<32x2xf32>
    %42 = vector.shape_cast %39 : vector<32x2xf32> to vector<1x32x2xf32>
    tpu.vector_store %arg5[%c0_29, %c0_30, %c0_31], %42 {strides = array<i32>} : memref<1x32x2xf32, #tpu.memory_space<vmem>>, vector<1x32x2xf32>,
    return
  }
  func.func @transform_0(%arg0: i32, %arg1: i32) -> (i32, i32) {
    %c1_i32 = arith.constant 1 : i32
    %0 = arith.muli %arg0, %c1_i32 : i32
    %1 = arith.addi %0, %arg1 : i32
    %c0_i32 = arith.constant 0 : i32
    %c0_i32_0 = arith.constant 0 : i32
    return %c0_i32, %1 : i32, i32
  }
  func.func @transform_1(%arg0: i32, %arg1: i32) -> (i32, i32) {
    %c0_i32 = arith.constant 0 : i32
    %c0_i32_0 = arith.constant 0 : i32
    %c0_i32_1 = arith.constant 0 : i32
    return %c0_i32, %c0_i32_0 : i32, i32
  }
  func.func @transform_2(%arg0: i32, %arg1: i32) -> (i32, i32) {
    %c0_i32 = arith.constant 0 : i32
    %c0_i32_0 = arith.constant 0 : i32
    %c0_i32_1 = arith.constant 0 : i32
    return %c0_i32, %c0_i32_0 : i32, i32
  }
  func.func @transform_3(%arg0: i32, %arg1: i32) -> (i32, i32, i32) {
    %c0_i32 = arith.constant 0 : i32
    %c0_i32_0 = arith.constant 0 : i32
    %c0_i32_1 = arith.constant 0 : i32
    return %arg0, %c0_i32, %c0_i32_0 : i32, i32, i32
  }
}

</mosaic_0001>

<llo_original>
// kernel: conv1d_bank_with_max_pool.2
$region0: #{conv1d_bank_with_max_pool.2}
  #allocation0 [shape = 'u32[]', space=smem, size = 0x4, offset = 0x4, fixed_abs, tag = 'smem constant byte address 0x4 - core index']
  #allocation1 [shape = 'u32[144,128]{1,0:T(1,128)}', space=vmem, size = 0x12000, scoped, tag = 'internal scratch']
  #allocation2 [shape = 'f32[17,32]{1,0:T(8,128)}', space=vmem, size = 0x3000, scoped, tag = 'scratch operand']
  %s0 = inlined_call_operand.vmem [shape: f32[4,32], index: 0, kind: input, shape index: {}]
  %s1 = inlined_call_operand.vmem [shape: f32[5,32], index: 1, kind: input, shape index: {}]
  %s2 = inlined_call_operand.vmem [shape: f32[32,17], index: 2, kind: input, shape index: {}]
  %s3 = inlined_call_operand.vmem [shape: f32[1,32,2], index: 3, kind: output, shape index: {}]
  %s4 = sld [smem:[#allocation0]]
  $region26: #{conv1d_bank_with_max_pool.2} parent=0
    _
  %s6 = ssub.s32 1, %s4
  %s7 = scalar_select 0, %s6, %s4
  // Predicated region
  $region2: #{conv1d_bank_with_max_pool.2} parent=0 // pred_check
    _
  $region3: #{conv1d_bank_with_max_pool.2} parent=0 // pred_check_branch
    %9 = sbr.rel (0) target = $region5
  $region4: #{conv1d_bank_with_max_pool.2} parent=0 // pred_region
    %s10 = sadd.s32 0, 0
    %p11 = scmp.lt.s32.totalorder %s10, 0
    %s12 = scalar_select %p11, %s10, 0
    %s13 = smul.addr %s12, 4
    %s14 = scalar_lea.vmem %s0, %s13
    %s15 = sadd.s32 0, 0
  $region5: #{conv1d_bank_with_max_pool.2} parent=0 // pred_fallthru
    _
  // Predicated region
  $region6: #{conv1d_bank_with_max_pool.2} parent=0 // pred_check
    _
  $region7: #{conv1d_bank_with_max_pool.2} parent=0 // pred_check_branch
    %17 = sbr.rel (0) target = $region9
  $region8: #{conv1d_bank_with_max_pool.2} parent=0 // pred_region
    _
  $region9: #{conv1d_bank_with_max_pool.2} parent=0 // pred_fallthru
    _
  // Predicated region
  $region10: #{conv1d_bank_with_max_pool.2} parent=0 // pred_check
    _
  $region11: #{conv1d_bank_with_max_pool.2} parent=0 // pred_check_branch
    %19 = sbr.rel (0) target = $region13
  $region12: #{conv1d_bank_with_max_pool.2} parent=0 // pred_region
    _
  $region13: #{conv1d_bank_with_max_pool.2} parent=0 // pred_fallthru
    _
  %s20 = sadd.s32 0, 0
  %p21 = scmp.lt.s32.totalorder %s20, 0
  %s22 = scalar_select %p21, %s20, 0
  %s23 = smul.addr %s22, 4
  %s24 = scalar_lea.vmem %s0, %s23
  %s25 = sadd.s32 0, 0
  %p26 = scmp.lt.s32.totalorder %s25, 0
  %s27 = scalar_select %p26, %s25, 0
  %s28 = smul.addr %s27, 4
  %s29 = scalar_lea.vmem %s0, %s28
  %s30 = sadd.s32 0, 0
  %p31 = scmp.eq.s32.totalorder 0, 0
  // Predicated region
  $region14: #{conv1d_bank_with_max_pool.2} parent=0 // pred_check
    %p32 = pneg %p31
  $region15: #{conv1d_bank_with_max_pool.2} parent=0 // pred_check_branch
    %34 = sbr.rel (%p32) target = $region17
  $region16: #{conv1d_bank_with_max_pool.2} parent=0 // pred_region
    %vm35 = vcmask 15360
    %36 = vst.msk [vmem:[%s3] sm:$0xff] %vm35, 0.0
    %37 = vst.msk [vmem:[%s3 + $0x8] sm:$0xff] %vm35, 0.0
    %38 = vst.msk [vmem:[%s3 + $0x10] sm:$0xff] %vm35, 0.0
    %39 = vst.msk [vmem:[%s3 + $0x18] sm:$0xff] %vm35, 0.0
  $region17: #{conv1d_bank_with_max_pool.2} parent=0 // pred_fallthru
    _
  %v40 = vld [vmem:[%s29] sm:$0xf]
  %v41 = vld [vmem:[%s1] sm:$0x1]
  %v42 = vlaneseq
  %v43 = vshrl.u32 %v42, 7
  %v44 = vsub.s32 0, %v43
  %v45 = vrot.slane %v41, %v44
  %47 = vrot.lane.b32.xlu0 %v45, 126
  %v48 = vpop.permute.xlu0 %47
  %v50 = vmul.f32 %v40, %v48
  %52 = vrot.lane.b32.xlu0 %v50, 2
  %v53 = vpop.permute.xlu0 %52
  %vm55 = vcmask 257040
  %56 = vst.msk [vmem:[#allocation2] sm:$0xf] %vm55, %v53
  %vm57 = vcmask 11264
  %58 = vst.msk [vmem:[#allocation2] sm:$0xf] %vm57, 0.0
  %v59 = vld [vmem:[%s1 + $0x1] sm:$0x1]
  %v60 = vlaneseq
  %v61 = vshrl.u32 %v60, 7
  %v62 = vsub.s32 0, %v61
  %v63 = vrot.slane %v59, %v62
  %65 = vrot.lane.b32.xlu0 %v63, 127
  %v66 = vpop.permute.xlu0 %65
  %v68 = vmul.f32 %v40, %v66
  %70 = vrot.lane.b32.xlu0 %v68, 1
  %v71 = vpop.permute.xlu0 %70
  %vm73 = vcmask 257032
  %74 = vst.msk [vmem:[#allocation2 + $0x4] sm:$0xf] %vm73, %v71
  %vm75 = vcmask 3072
  %76 = vst.msk [vmem:[#allocation2 + $0x4] sm:$0xf] %vm75, 0.0
  %vm77 = vcmask 257024
  %78 = vst.msk [vmem:[#allocation2 + $0x8] sm:$0xf] %vm77, %v40
  %v79 = vld [vmem:[%s1 + $0x3] sm:$0x1]
  %v80 = vlaneseq
  %v81 = vshrl.u32 %v80, 7
  %v82 = vsub.s32 0, %v81
  %v83 = vrot.slane %v79, %v82
  %85 = vrot.lane.b32.xlu0 %v83, 1
  %v86 = vpop.permute.xlu0 %85
  %v88 = vmul.f32 %v40, %v86
  %90 = vrot.lane.b32.xlu0 %v88, 127
  %v91 = vpop.permute.xlu0 %90
  %vm93 = vcmask 248832
  %94 = vst.msk [vmem:[#allocation2 + $0xc] sm:$0xf] %vm93, %v91
  %vm95 = vcmask 257272
  %96 = vst.msk [vmem:[#allocation2 + $0xc] sm:$0xf] %vm95, 0.0
  %vm97 = vcmask 253952
  %98 = vst.msk [vmem:[#allocation2 + $0x10] sm:$0x1] %vm97, 1.0
  %v99 = vld [vmem:[%s2] sm:$0xff]
  %v100 = vld [vmem:[%s2 + $0x8] sm:$0xff]
  %v101 = vld [vmem:[%s2 + $0x10] sm:$0xff]
  %v102 = vld [vmem:[%s2 + $0x18] sm:$0xff]
  %v103 = vld [vmem:[#allocation2] sm:$0xff]
  %v104 = vld [vmem:[#allocation2 + $0x8] sm:$0xff]
  %v105 = vld [vmem:[#allocation2 + $0x10] sm:$0x1]
  %vm106 = vcmask 138240
  %v108 = vsel %vm106, %v99, 0
  %v111 = vsel %vm106, %v100, 0
  %v114 = vsel %vm106, %v101, 0
  %v117 = vsel %vm106, %v102, 0
  %vm119 = vcmask 1040384
  %v121 = vsel %vm119, %v105, 0
  %123 = vmatprep.subr.mxu0 0.0
  %124 = vmatpush1.msra.mxu0 %v103
  %125 = vmatprep.subr.mxu0 0.0
  %126 = vmatpush1.msra.mxu0 %v104
  %127 = vmatprep.subr.mxu0 0.0
  %128 = vmatpush1.msra.mxu0 %v121
  %129 = vmatprep.subr.mxu0 0.0
  %130 = vmatpush1.msra.mxu0 0.0
  %131 = vmatprep.subr.mxu0 0.0
  %132 = vmatpush1.msra.mxu0 0.0
  %133 = vmatprep.subr.mxu0 0.0
  %134 = vmatpush1.msra.mxu0 0.0
  %135 = vmatprep.subr.mxu0 0.0
  %136 = vmatpush1.msra.mxu0 0.0
  %137 = vmatprep.subr.mxu0 0.0
  %138 = vmatpush1.msra.mxu0 0.0
  %139 = vmatprep.subr.mxu0 0.0
  %140 = vmatpush1.msra.mxu0 0.0
  %141 = vmatprep.subr.mxu0 0.0
  %142 = vmatpush1.msra.mxu0 0.0
  %143 = vmatprep.subr.mxu0 0.0
  %144 = vmatpush1.msra.mxu0 0.0
  %145 = vmatprep.subr.mxu0 0.0
  %146 = vmatpush1.msra.mxu0 0.0
  %147 = vmatprep.subr.mxu0 0.0
  %148 = vmatpush1.msra.mxu0 0.0
  %149 = vmatprep.subr.mxu0 0.0
  %150 = vmatpush1.msra.mxu0 0.0
  %151 = vmatprep.subr.mxu0 0.0
  %152 = vmatpush1.msra.mxu0 0.0
  %153 = vmatprep.subr.mxu0 0.0
  %154 = vmatpush1.msra.mxu0 0.0
  %155 = vmatprep.subr.mxu0 0.0
  %156 = vmatpush1.msra.mxu0 0.0
  %157 = vmatprep.subr.mxu0 0.0
  %158 = vmatpush1.msra.mxu0 0.0
  %159 = vmatprep.subr.mxu0 0.0
  %160 = vmatpush1.msra.mxu0 0.0
  %161 = vmatprep.subr.mxu0 0.0
  %162 = vmatpush1.msra.mxu0 0.0
  %163 = vmatprep.subr.mxu0 0.0
  %164 = vmatpush1.msra.mxu0 0.0
  %165 = vmatprep.subr.mxu0 0.0
  %166 = vmatpush1.msra.mxu0 0.0
  %167 = vmatprep.subr.mxu0 0.0
  %168 = vmatpush1.msra.mxu0 0.0
  %169 = vmatprep.subr.mxu0 0.0
  %170 = vmatpush1.msra.mxu0 0.0
  %171 = vmatprep.subr.mxu0 0.0
  %172 = vmatpush1.msra.mxu0 0.0
  %173 = vmatprep.subr.mxu0 0.0
  %174 = vmatpush1.msra.mxu0 0.0
  %175 = vmatprep.subr.mxu0 0.0
  %176 = vmatpush1.msra.mxu0 0.0
  %177 = vmatprep.subr.mxu0 0.0
  %178 = vmatpush1.msra.mxu0 0.0
  %179 = vmatprep.subr.mxu0 0.0
  %180 = vmatpush1.msra.mxu0 0.0
  %181 = vmatprep.subr.mxu0 0.0
  %182 = vmatpush1.msra.mxu0 0.0
  %183 = vmatprep.subr.mxu0 0.0
  %184 = vmatpush1.msra.mxu0 0.0
  %185 = vmatprep.subr.mxu0 0.0
  %186 = vmatpush1.msra.mxu0 0.0
  %187 = vmatprep.mubr.f32.mxu0 0.0
  %188 = vmatmul.mubr.f32.gmra.mrb[0].mxu0 %v108
  %v189 = vpop.f32.mrb[0].mxu0
  %v190 = vadd.f32 0.0, %v189
  %v191 = vpop.f32.mrb[0].mxu0
  %192 = vmatprep.mubr.f32.mxu0 0.0
  %193 = vmatmul.mubr.f32.gmra.mrb[0].mxu0 %v111
  %v194 = vpop.f32.mrb[0].mxu0
  %v195 = vadd.f32 0.0, %v194
  %v196 = vpop.f32.mrb[0].mxu0
  %197 = vmatprep.mubr.f32.mxu0 0.0
  %198 = vmatmul.mubr.f32.gmra.mrb[0].mxu0 %v114
  %v199 = vpop.f32.mrb[0].mxu0
  %v200 = vadd.f32 0.0, %v199
  %v201 = vpop.f32.mrb[0].mxu0
  %202 = vmatprep.mubr.f32.mxu0 0.0
  %203 = vmatmul.mubr.f32.gmra.mrb[0].mxu0 %v117
  %v204 = vpop.f32.mrb[0].mxu0
  %v205 = vadd.f32 0.0, %v204
  %v206 = vpop.f32.mrb[0].mxu0
  %207 = vdwg.mxu0
  %vm208 = vcmask 261120
  %v209 = vsel %vm208, %v190, 0.0
  %210 = vadd.xlane.f32.xlu0 %v209
  %v211 = vpop.xlane.xlu0 %210
  %v212 = vsel %vm208, %v195, 0.0
  %213 = vadd.xlane.f32.xlu0 %v212
  %v214 = vpop.xlane.xlu0 %213
  %v215 = vsel %vm208, %v200, 0.0
  %216 = vadd.xlane.f32.xlu0 %v215
  %v217 = vpop.xlane.xlu0 %216
  %v218 = vsel %vm208, %v205, 0.0
  %219 = vadd.xlane.f32.xlu0 %v218
  %v220 = vpop.xlane.xlu0 %219
  %v221 = vmul.f32 %v190, %v190
  %v222 = vmul.f32 %v195, %v195
  %v223 = vmul.f32 %v200, %v200
  %v224 = vmul.f32 %v205, %v205
  %v225 = vsel %vm208, %v221, 0.0
  %226 = vadd.xlane.f32.xlu0 %v225
  %v227 = vpop.xlane.xlu0 %226
  %v228 = vsel %vm208, %v222, 0.0
  %229 = vadd.xlane.f32.xlu0 %v228
  %v230 = vpop.xlane.xlu0 %229
  %v231 = vsel %vm208, %v223, 0.0
  %232 = vadd.xlane.f32.xlu0 %v231
  %v233 = vpop.xlane.xlu0 %232
  %v234 = vsel %vm208, %v224, 0.0
  %235 = vadd.xlane.f32.xlu0 %v234
  %v236 = vpop.xlane.xlu0 %235
  %v237 = vld [vmem:[%s3] sm:$0xff]
  %v238 = vld [vmem:[%s3 + $0x8] sm:$0xff]
  %v239 = vld [vmem:[%s3 + $0x10] sm:$0xff]
  %v240 = vld [vmem:[%s3 + $0x18] sm:$0xff]
  %vm241 = vcmask 7168
  %v242 = vsel %vm241, %v211, %v227
  %v243 = vsel %vm241, %v214, %v230
  %v244 = vsel %vm241, %v217, %v233
  %v245 = vsel %vm241, %v220, %v236
  %v246 = vadd.f32 %v237, %v242
  %v247 = vadd.f32 %v238, %v243
  %v248 = vadd.f32 %v239, %v244
  %v249 = vadd.f32 %v240, %v245
  %vm250 = vcmask 15360
  %251 = vst.msk [vmem:[%s3] sm:$0xff] %vm250, %v246
  %252 = vst.msk [vmem:[%s3 + $0x8] sm:$0xff] %vm250, %v247
  %253 = vst.msk [vmem:[%s3 + $0x10] sm:$0xff] %vm250, %v248
  %254 = vst.msk [vmem:[%s3 + $0x18] sm:$0xff] %vm250, %v249
  // Predicated region
  $region18: #{conv1d_bank_with_max_pool.2} parent=0 // pred_check
    _
  $region19: #{conv1d_bank_with_max_pool.2} parent=0 // pred_check_branch
    %256 = sbr.rel (0) target = $region21
  $region20: #{conv1d_bank_with_max_pool.2} parent=0 // pred_region
    _
  $region21: #{conv1d_bank_with_max_pool.2} parent=0 // pred_fallthru
    _
  // Predicated region
  $region22: #{conv1d_bank_with_max_pool.2} parent=0 // pred_check
    _
  $region23: #{conv1d_bank_with_max_pool.2} parent=0 // pred_check_branch
    %258 = sbr.rel (0) target = $region25
  $region24: #{conv1d_bank_with_max_pool.2} parent=0 // pred_region
    _
  $region25: #{conv1d_bank_with_max_pool.2} parent=0 // pred_fallthru
    _

// kernel: conv1d_bank_with_max_pool.3
$region0: #{conv1d_bank_with_max_pool.3}
  #allocation0 [shape = 'u32[]', space=smem, size = 0x4, offset = 0x4, fixed_abs, tag = 'smem constant byte address 0x4 - core index']
  #allocation1 [shape = 'u32[144,128]{1,0:T(1,128)}', space=vmem, size = 0x12000, scoped, tag = 'internal scratch']
  #allocation2 [shape = 'f32[17,32]{1,0:T(8,128)}', space=vmem, size = 0x3000, scoped, tag = 'scratch operand']
  %s0 = inlined_call_operand.vmem [shape: f32[4,32], index: 0, kind: input, shape index: {}]
  %s1 = inlined_call_operand.vmem [shape: f32[5,32], index: 1, kind: input, shape index: {}]
  %s2 = inlined_call_operand.vmem [shape: f32[32,17], index: 2, kind: input, shape index: {}]
  %s3 = inlined_call_operand.vmem [shape: f32[32,32], index: 3, kind: output, shape index: {}]
  %s4 = sld [smem:[#allocation0]]
  $region22: #{conv1d_bank_with_max_pool.3} parent=0
    _
  %s6 = ssub.s32 1, %s4
  %s7 = scalar_select 0, %s6, %s4
  // Predicated region
  $region2: #{conv1d_bank_with_max_pool.3} parent=0 // pred_check
    _
  $region3: #{conv1d_bank_with_max_pool.3} parent=0 // pred_check_branch
    %9 = sbr.rel (0) target = $region5
  $region4: #{conv1d_bank_with_max_pool.3} parent=0 // pred_region
    _
  $region5: #{conv1d_bank_with_max_pool.3} parent=0 // pred_fallthru
    _
  // Predicated region
  $region6: #{conv1d_bank_with_max_pool.3} parent=0 // pred_check
    _
  $region7: #{conv1d_bank_with_max_pool.3} parent=0 // pred_check_branch
    %11 = sbr.rel (0) target = $region9
  $region8: #{conv1d_bank_with_max_pool.3} parent=0 // pred_region
    _
  $region9: #{conv1d_bank_with_max_pool.3} parent=0 // pred_fallthru
    _
  // Predicated region
  $region10: #{conv1d_bank_with_max_pool.3} parent=0 // pred_check
    _
  $region11: #{conv1d_bank_with_max_pool.3} parent=0 // pred_check_branch
    %13 = sbr.rel (0) target = $region13
  $region12: #{conv1d_bank_with_max_pool.3} parent=0 // pred_region
    _
  $region13: #{conv1d_bank_with_max_pool.3} parent=0 // pred_fallthru
    _
  %v14 = vld [vmem:[%s0] sm:$0xf]
  %v15 = vld [vmem:[%s1] sm:$0x1]
  %v16 = vlaneseq
  %v17 = vshrl.u32 %v16, 7
  %v18 = vsub.s32 0, %v17
  %v19 = vrot.slane %v15, %v18
  %21 = vrot.lane.b32.xlu0 %v19, 126
  %v22 = vpop.permute.xlu0 %21
  %v24 = vmul.f32 %v14, %v22
  %26 = vrot.lane.b32.xlu0 %v24, 2
  %v27 = vpop.permute.xlu0 %26
  %vm29 = vcmask 257040
  %30 = vst.msk [vmem:[#allocation2] sm:$0xf] %vm29, %v27
  %vm31 = vcmask 11264
  %32 = vst.msk [vmem:[#allocation2] sm:$0xf] %vm31, 0.0
  %v33 = vld [vmem:[%s1 + $0x1] sm:$0x1]
  %v34 = vlaneseq
  %v35 = vshrl.u32 %v34, 7
  %v36 = vsub.s32 0, %v35
  %v37 = vrot.slane %v33, %v36
  %39 = vrot.lane.b32.xlu0 %v37, 127
  %v40 = vpop.permute.xlu0 %39
  %v42 = vmul.f32 %v14, %v40
  %44 = vrot.lane.b32.xlu0 %v42, 1
  %v45 = vpop.permute.xlu0 %44
  %vm47 = vcmask 257032
  %48 = vst.msk [vmem:[#allocation2 + $0x4] sm:$0xf] %vm47, %v45
  %vm49 = vcmask 3072
  %50 = vst.msk [vmem:[#allocation2 + $0x4] sm:$0xf] %vm49, 0.0
  %vm51 = vcmask 257024
  %52 = vst.msk [vmem:[#allocation2 + $0x8] sm:$0xf] %vm51, %v14
  %v53 = vld [vmem:[%s1 + $0x3] sm:$0x1]
  %v54 = vlaneseq
  %v55 = vshrl.u32 %v54, 7
  %v56 = vsub.s32 0, %v55
  %v57 = vrot.slane %v53, %v56
  %59 = vrot.lane.b32.xlu0 %v57, 1
  %v60 = vpop.permute.xlu0 %59
  %v62 = vmul.f32 %v14, %v60
  %64 = vrot.lane.b32.xlu0 %v62, 127
  %v65 = vpop.permute.xlu0 %64
  %vm67 = vcmask 248832
  %68 = vst.msk [vmem:[#allocation2 + $0xc] sm:$0xf] %vm67, %v65
  %vm69 = vcmask 257272
  %70 = vst.msk [vmem:[#allocation2 + $0xc] sm:$0xf] %vm69, 0.0
  %vm71 = vcmask 253952
  %72 = vst.msk [vmem:[#allocation2 + $0x10] sm:$0x1] %vm71, 1.0
  %v73 = vld [vmem:[%s2] sm:$0xff]
  %v74 = vld [vmem:[%s2 + $0x8] sm:$0xff]
  %v75 = vld [vmem:[%s2 + $0x10] sm:$0xff]
  %v76 = vld [vmem:[%s2 + $0x18] sm:$0xff]
  %v77 = vld [vmem:[#allocation2] sm:$0xff]
  %v78 = vld [vmem:[#allocation2 + $0x8] sm:$0xff]
  %v79 = vld [vmem:[#allocation2 + $0x10] sm:$0x1]
  %vm80 = vcmask 138240
  %v82 = vsel %vm80, %v73, 0
  %v85 = vsel %vm80, %v74, 0
  %v88 = vsel %vm80, %v75, 0
  %v91 = vsel %vm80, %v76, 0
  %vm93 = vcmask 1040384
  %v95 = vsel %vm93, %v79, 0
  %97 = vmatprep.subr.mxu0 0.0
  %98 = vmatpush1.msra.mxu0 %v77
  %99 = vmatprep.subr.mxu0 0.0
  %100 = vmatpush1.msra.mxu0 %v78
  %101 = vmatprep.subr.mxu0 0.0
  %102 = vmatpush1.msra.mxu0 %v95
  %103 = vmatprep.subr.mxu0 0.0
  %104 = vmatpush1.msra.mxu0 0.0
  %105 = vmatprep.subr.mxu0 0.0
  %106 = vmatpush1.msra.mxu0 0.0
  %107 = vmatprep.subr.mxu0 0.0
  %108 = vmatpush1.msra.mxu0 0.0
  %109 = vmatprep.subr.mxu0 0.0
  %110 = vmatpush1.msra.mxu0 0.0
  %111 = vmatprep.subr.mxu0 0.0
  %112 = vmatpush1.msra.mxu0 0.0
  %113 = vmatprep.subr.mxu0 0.0
  %114 = vmatpush1.msra.mxu0 0.0
  %115 = vmatprep.subr.mxu0 0.0
  %116 = vmatpush1.msra.mxu0 0.0
  %117 = vmatprep.subr.mxu0 0.0
  %118 = vmatpush1.msra.mxu0 0.0
  %119 = vmatprep.subr.mxu0 0.0
  %120 = vmatpush1.msra.mxu0 0.0
  %121 = vmatprep.subr.mxu0 0.0
  %122 = vmatpush1.msra.mxu0 0.0
  %123 = vmatprep.subr.mxu0 0.0
  %124 = vmatpush1.msra.mxu0 0.0
  %125 = vmatprep.subr.mxu0 0.0
  %126 = vmatpush1.msra.mxu0 0.0
  %127 = vmatprep.subr.mxu0 0.0
  %128 = vmatpush1.msra.mxu0 0.0
  %129 = vmatprep.subr.mxu0 0.0
  %130 = vmatpush1.msra.mxu0 0.0
  %131 = vmatprep.subr.mxu0 0.0
  %132 = vmatpush1.msra.mxu0 0.0
  %133 = vmatprep.subr.mxu0 0.0
  %134 = vmatpush1.msra.mxu0 0.0
  %135 = vmatprep.subr.mxu0 0.0
  %136 = vmatpush1.msra.mxu0 0.0
  %137 = vmatprep.subr.mxu0 0.0
  %138 = vmatpush1.msra.mxu0 0.0
  %139 = vmatprep.subr.mxu0 0.0
  %140 = vmatpush1.msra.mxu0 0.0
  %141 = vmatprep.subr.mxu0 0.0
  %142 = vmatpush1.msra.mxu0 0.0
  %143 = vmatprep.subr.mxu0 0.0
  %144 = vmatpush1.msra.mxu0 0.0
  %145 = vmatprep.subr.mxu0 0.0
  %146 = vmatpush1.msra.mxu0 0.0
  %147 = vmatprep.subr.mxu0 0.0
  %148 = vmatpush1.msra.mxu0 0.0
  %149 = vmatprep.subr.mxu0 0.0
  %150 = vmatpush1.msra.mxu0 0.0
  %151 = vmatprep.subr.mxu0 0.0
  %152 = vmatpush1.msra.mxu0 0.0
  %153 = vmatprep.subr.mxu0 0.0
  %154 = vmatpush1.msra.mxu0 0.0
  %155 = vmatprep.subr.mxu0 0.0
  %156 = vmatpush1.msra.mxu0 0.0
  %157 = vmatprep.subr.mxu0 0.0
  %158 = vmatpush1.msra.mxu0 0.0
  %159 = vmatprep.subr.mxu0 0.0
  %160 = vmatpush1.msra.mxu0 0.0
  %161 = vmatprep.mubr.f32.mxu0 0.0
  %162 = vmatmul.mubr.f32.gmra.mrb[0].mxu0 %v82
  %v163 = vpop.f32.mrb[0].mxu0
  %v164 = vadd.f32 0.0, %v163
  %v165 = vpop.f32.mrb[0].mxu0
  %166 = vmatprep.mubr.f32.mxu0 0.0
  %167 = vmatmul.mubr.f32.gmra.mrb[0].mxu0 %v85
  %v168 = vpop.f32.mrb[0].mxu0
  %v169 = vadd.f32 0.0, %v168
  %v170 = vpop.f32.mrb[0].mxu0
  %171 = vmatprep.mubr.f32.mxu0 0.0
  %172 = vmatmul.mubr.f32.gmra.mrb[0].mxu0 %v88
  %v173 = vpop.f32.mrb[0].mxu0
  %v174 = vadd.f32 0.0, %v173
  %v175 = vpop.f32.mrb[0].mxu0
  %176 = vmatprep.mubr.f32.mxu0 0.0
  %177 = vmatmul.mubr.f32.gmra.mrb[0].mxu0 %v91
  %v178 = vpop.f32.mrb[0].mxu0
  %v179 = vadd.f32 0.0, %v178
  %v180 = vpop.f32.mrb[0].mxu0
  %181 = vdwg.mxu0
  %v182 = vmax.f32 %v164, 0.0
  %v183 = vmax.f32 %v169, 0.0
  %v184 = vmax.f32 %v174, 0.0
  %v185 = vmax.f32 %v179, 0.0
  %v186 = vld [vmem:[%s1 + $0x4] sm:$0x1]
  %v187 = vsub.f32 1.0, %v186
  %v188 = vlaneseq
  %v189 = vshrl.u32 %v188, 7
  %v190 = vsub.s32 0, %v189
  %v191 = vrot.slane %v187, %v190
  %193 = vrot.lane.b32.xlu0 %v191, 127
  %v194 = vpop.permute.xlu0 %193
  %v196 = vmul.f32 %v182, %v194
  %v197 = vmul.f32 %v183, %v194
  %v198 = vmul.f32 %v184, %v194
  %v199 = vmul.f32 %v185, %v194
  %204 = vrot.lane.b32.xlu0 %v196, 1
  %v205 = vpop.permute.xlu0 %204
  %206 = vrot.lane.b32.xlu0 %v197, 1
  %v207 = vpop.permute.xlu0 %206
  %208 = vrot.lane.b32.xlu0 %v198, 1
  %v209 = vpop.permute.xlu0 %208
  %210 = vrot.lane.b32.xlu0 %v199, 1
  %v211 = vpop.permute.xlu0 %210
  %v216 = vmax.f32 %v182, %v205
  %v217 = vmax.f32 %v183, %v207
  %v218 = vmax.f32 %v184, %v209
  %v219 = vmax.f32 %v185, %v211
  %vm220 = vcmask 261128
  %221 = vst.msk [vmem:[%s3] sm:$0xff] %vm220, %v216
  %222 = vst.msk [vmem:[%s3 + $0x8] sm:$0xff] %vm220, %v217
  %223 = vst.msk [vmem:[%s3 + $0x10] sm:$0xff] %vm220, %v218
  %224 = vst.msk [vmem:[%s3 + $0x18] sm:$0xff] %vm220, %v219
  %vm225 = vcmask 7168
  %226 = vst.msk [vmem:[%s3] sm:$0xff] %vm225, %v182
  %227 = vst.msk [vmem:[%s3 + $0x8] sm:$0xff] %vm225, %v183
  %228 = vst.msk [vmem:[%s3 + $0x10] sm:$0xff] %vm225, %v184
  %229 = vst.msk [vmem:[%s3 + $0x18] sm:$0xff] %vm225, %v185
  // Predicated region
  $region14: #{conv1d_bank_with_max_pool.3} parent=0 // pred_check
    _
  $region15: #{conv1d_bank_with_max_pool.3} parent=0 // pred_check_branch
    %231 = sbr.rel (0) target = $region17
  $region16: #{conv1d_bank_with_max_pool.3} parent=0 // pred_region
    _
  $region17: #{conv1d_bank_with_max_pool.3} parent=0 // pred_fallthru
    _
  // Predicated region
  $region18: #{conv1d_bank_with_max_pool.3} parent=0 // pred_check
    _
  $region19: #{conv1d_bank_with_max_pool.3} parent=0 // pred_check_branch
    %233 = sbr.rel (0) target = $region21
  $region20: #{conv1d_bank_with_max_pool.3} parent=0 // pred_region
    _
  $region21: #{conv1d_bank_with_max_pool.3} parent=0 // pred_fallthru
    _

</llo_original>
